<compile_context>
chip_gen: v6e
topology: v6e:2x2x1
jax: 0.10.0
libtpu: 0.0.40
codegen_flags: <defaults>
</compile_context>

<pallas_src>
import functools

import jax
import jax.numpy as jnp
import numpy as np
from jax import lax
from jax.experimental import pallas as pl
from jax.experimental.pallas import tpu as pltpu


def _residual_kernel(x_ref, w1_ref, w2_ref, o_ref, *, seq_len):
    # x_ref : (R, C_in)  f32, R = seqs_per_block * seq_len
    # w1_ref: (3*C_in, res_h) bf16  -- k=3 conv weights in tap-major im2col layout
    # w2_ref: (res_h, h_dim)  bf16  -- k=1 conv weights
    # o_ref : (R, h_dim)
    R = x_ref.shape[0]

    x = x_ref[...]                       # resident block; reused for residual add
    a = jnp.maximum(x, 0.0)              # ReLU in f32

    # In-kernel halo handling: +/-1 shifts along the sublane (row) axis via the
    # XLU rotate; rows that would cross a sequence boundary (or wrap around the
    # block) are zeroed, which reproduces Conv1d's zero padding (ReLU(0) == 0).
    row = lax.broadcasted_iota(jnp.int32, (R, 1), 0)
    a_prev = jnp.where(row % seq_len == 0, 0.0, pltpu.roll(a, 1, 0))
    a_next = jnp.where(row % seq_len == seq_len - 1, 0.0, pltpu.roll(a, R - 1, 0))

    # im2col: single fused MXU matmul with K = 3*C_in (bf16 operands, f32 acc).
    a_cat = jnp.concatenate([a_prev, a, a_next], axis=-1)        # (R, 3*C_in)
    h = jnp.dot(a_cat.astype(w1_ref.dtype), w1_ref[...],
                preferred_element_type=jnp.float32)              # (R, res_h)
    h = jnp.maximum(h, 0.0)                                      # ReLU in f32

    # Conv1d(kernel_size=1) == plain matmul over channels.
    y = jnp.dot(h.astype(w2_ref.dtype), w2_ref[...],
                preferred_element_type=jnp.float32)              # (R, h_dim)

    o_ref[...] = (x + y).astype(o_ref.dtype)                     # residual add (f32)


def residual_layer(x_ncl, w1_oik, w2_oik, *, mxu_dtype=jnp.bfloat16,
                   target_rows=512):
    """x_ncl: (N, C_in, L). w1_oik: (res_h, C_in, 3). w2_oik: (h_dim, res_h, 1)."""
    N, C_in, L = x_ncl.shape
    res_h = w1_oik.shape[0]
    h_dim = w2_oik.shape[0]
    assert h_dim == C_in, "residual add requires h_dim == in_dim"

    # Interface glue: PyTorch NCL -> channels-last rows, batch folded into M.
    # (No jnp.pad pass anymore -- halo is handled inside the kernel.)
    M = N * L
    x_rows = jnp.transpose(x_ncl, (0, 2, 1)).reshape(M, C_in)          # (M, C_in)

    # Conv1 weights as one (3*C_in, res_h) im2col matrix (tap-major); conv2 as
    # (res_h, h_dim).  Pre-cast to bf16 for the MXU.
    w1_im2col = jnp.transpose(w1_oik, (2, 1, 0)).reshape(3 * C_in, res_h)
    w1_im2col = w1_im2col.astype(mxu_dtype)
    w2_mat = jnp.transpose(w2_oik[:, :, 0], (1, 0)).astype(mxu_dtype)  # (res_h, h_dim)

    # Tile M in whole sequences so conv halos never cross block boundaries.
    # Keep blocks at <= ~target_rows rows (tiny VMEM footprint, v7x-safe) while
    # leaving enough grid steps to shard across TensorCores when N is large.
    seqs_per_block = N      # fallback: one block covering all rows (always legal)
    for s in range(1, N + 1):
        rows = s * L
        if N % s == 0 and rows % 8 == 0 and rows <= target_rows:
            seqs_per_block = s
    rows_per_block = seqs_per_block * L
    grid = (N // seqs_per_block,)

    itemsize = jnp.dtype(x_ncl.dtype).itemsize
    flops = 2 * M * (3 * C_in * res_h + res_h * h_dim)
    bytes_accessed = (M * C_in * itemsize                 # input rows
                      + M * h_dim * itemsize              # output rows
                      + w1_im2col.size * 2 + w2_mat.size * 2)

    out_rows = pl.pallas_call(
        functools.partial(_residual_kernel, seq_len=L),
        out_shape=jax.ShapeDtypeStruct((M, h_dim), x_ncl.dtype),
        grid_spec=pltpu.PrefetchScalarGridSpec(
            num_scalar_prefetch=0,
            grid=grid,
            in_specs=[
                pl.BlockSpec((rows_per_block, C_in), lambda i: (i, 0)),
                pl.BlockSpec((3 * C_in, res_h), lambda i: (0, 0)),
                pl.BlockSpec((res_h, h_dim), lambda i: (0, 0)),
            ],
            out_specs=pl.BlockSpec((rows_per_block, h_dim), lambda i: (i, 0)),
        ),
        compiler_params=pltpu.CompilerParams(
            dimension_semantics=("parallel",),
        ),
        cost_estimate=pl.CostEstimate(
            flops=flops, transcendentals=0, bytes_accessed=bytes_accessed),
    )(x_rows, w1_im2col, w2_mat)

    # Back to PyTorch (N, C, L) layout.
    return jnp.transpose(out_rows.reshape(N, L, h_dim), (0, 2, 1))


def residual_layer_ref(x, w1, w2):
    """Pure-JAX f32 reference matching PyTorch Conv1d semantics (NCL / OIK)."""
    a = jax.nn.relu(x)
    h = jax.lax.conv_general_dilated(
        a, w1, window_strides=(1,), padding=((1, 1),),
        dimension_numbers=("NCH", "OIH", "NCH"))
    h = jax.nn.relu(h)
    y = jax.lax.conv_general_dilated(
        h, w2, window_strides=(1,), padding=((0, 0),),
        dimension_numbers=("NCH", "OIH", "NCH"))
    return x + y


if __name__ == "__main__":
    # ResidualLayer(in_dim=32, h_dim=32, res_h_dim=16); input (N=2, C=32, L=16)
    in_dim, h_dim, res_h_dim = 32, 32, 16
    N, L = 2, 16

    key = jax.random.PRNGKey(0)
    kx, k1, k2 = jax.random.split(key, 3)
    x = jax.random.normal(kx, (N, in_dim, L), dtype=jnp.float32)
    # deterministic synthetic weights (PyTorch Conv1d weight layout: (out, in, k))
    w1 = jax.random.normal(k1, (res_h_dim, in_dim, 3), dtype=jnp.float32) * 0.1
    w2 = jax.random.normal(k2, (h_dim, res_h_dim, 1), dtype=jnp.float32) * 0.1

    out = jax.block_until_ready(residual_layer(x, w1, w2))
    ref = jax.block_until_ready(residual_layer_ref(x, w1, w2))

    # bf16 MXU operands (f32 accumulation) => slightly looser tolerance than pure f32.
    np.testing.assert_allclose(np.asarray(out), np.asarray(ref), atol=2e-2, rtol=2e-2)
    print("KERNEL_OK")
</pallas_src>

<mosaic_0001>
module attributes {stable_mosaic.version = 11 : i64} {
  func.func @_residual_kernel(%arg0: i32, %arg1: memref<32x32xf32, #tpu.memory_space<vmem>>, %arg2: memref<96x16xbf16, #tpu.memory_space<vmem>>, %arg3: memref<16x32xbf16, #tpu.memory_space<vmem>>, %arg4: memref<32x32xf32, #tpu.memory_space<vmem>>) attributes {dimension_semantics = [#tpu.dimension_semantics<parallel>], iteration_bounds = array<i64: 1>, scalar_prefetch = 0 : i64, scratch_operands = 0 : i64, tpu.core_type = #tpu.core_type<tc>, window_params = [{transform_indices = @transform_0, window_bounds = array<i64: 32, 32>}, {pipeline_mode = #tpu.pipeline_mode<synchronous>, transform_indices = @transform_1, window_bounds = array<i64: 96, 16>}, {pipeline_mode = #tpu.pipeline_mode<synchronous>, transform_indices = @transform_2, window_bounds = array<i64: 16, 32>}, {transform_indices = @transform_3, window_bounds = array<i64: 32, 32>}]} {
    %c0 = arith.constant 0 : index
    %c0_0 = arith.constant 0 : index
    %0 = vector.load %arg1[%c0, %c0_0] : memref<32x32xf32, #tpu.memory_space<vmem>>, vector<32x32xf32>
    %cst = arith.constant 0.000000e+00 : f32
    %1 = vector.broadcast %cst : f32 to vector<32x32xf32>
    %2 = arith.maximumf %0, %1 : vector<32x32xf32>
    %3 = tpu.iota {dimensions = array<i32: 0>} : vector<32x1xi32>
    %c16_i32 = arith.constant 16 : i32
    %c0_i32 = arith.constant 0 : i32
    %4 = arith.cmpi eq, %c16_i32, %c0_i32 : i32
    %c1_i32 = arith.constant 1 : i32
    %5 = arith.select %4, %c1_i32, %c16_i32 : i32
    %6 = vector.broadcast %5 : i32 to vector<32x1xi32>
    %7 = arith.remsi %3, %6 : vector<32x1xi32>
    %c0_i32_1 = arith.constant 0 : i32
    %8 = vector.broadcast %c0_i32_1 : i32 to vector<32x1xi32>
    %9 = arith.cmpi ne, %7, %8 : vector<32x1xi32>
    %c0_i32_2 = arith.constant 0 : i32
    %10 = vector.broadcast %c0_i32_2 : i32 to vector<32x1xi32>
    %11 = arith.cmpi slt, %7, %10 : vector<32x1xi32>
    %c0_i32_3 = arith.constant 0 : i32
    %12 = arith.cmpi slt, %5, %c0_i32_3 : i32
    %13 = vector.broadcast %12 : i1 to vector<32x1xi1>
    %14 = vector.broadcast %13 : vector<32x1xi1> to vector<32x1xi1>
    %15 = arith.xori %11, %14 : vector<32x1xi1>
    %16 = arith.andi %15, %9 : vector<32x1xi1>
    %17 = vector.broadcast %5 : i32 to vector<32x1xi32>
    %18 = arith.addi %7, %17 : vector<32x1xi32>
    %19 = arith.select %16, %18, %7 : vector<32x1xi1>, vector<32x1xi32>
    %c0_i32_4 = arith.constant 0 : i32
    %20 = vector.broadcast %c0_i32_4 : i32 to vector<32x1xi32>
    %21 = arith.cmpi eq, %19, %20 : vector<32x1xi32>
    %c1_i32_5 = arith.constant 1 : i32
    %22 = tpu.dynamic_rotate %2 by %c1_i32_5 dim 0 : vector<32x32xf32>, i32 -> vector<32x32xf32>
    %cst_6 = arith.constant 0.000000e+00 : f32
    %23 = vector.shape_cast %21 : vector<32x1xi1> to vector<32x1xi1>
    %24 = vector.broadcast %23 : vector<32x1xi1> to vector<32x32xi1>
    %25 = vector.broadcast %cst_6 : f32 to vector<32x32xf32>
    %26 = arith.select %24, %25, %22 : vector<32x32xi1>, vector<32x32xf32>
    %c16_i32_7 = arith.constant 16 : i32
    %c0_i32_8 = arith.constant 0 : i32
    %27 = arith.cmpi eq, %c16_i32_7, %c0_i32_8 : i32
    %c1_i32_9 = arith.constant 1 : i32
    %28 = arith.select %27, %c1_i32_9, %c16_i32_7 : i32
    %29 = vector.broadcast %28 : i32 to vector<32x1xi32>
    %30 = arith.remsi %3, %29 : vector<32x1xi32>
    %c0_i32_10 = arith.constant 0 : i32
    %31 = vector.broadcast %c0_i32_10 : i32 to vector<32x1xi32>
    %32 = arith.cmpi ne, %30, %31 : vector<32x1xi32>
    %c0_i32_11 = arith.constant 0 : i32
    %33 = vector.broadcast %c0_i32_11 : i32 to vector<32x1xi32>
    %34 = arith.cmpi slt, %30, %33 : vector<32x1xi32>
    %c0_i32_12 = arith.constant 0 : i32
    %35 = arith.cmpi slt, %28, %c0_i32_12 : i32
    %36 = vector.broadcast %35 : i1 to vector<32x1xi1>
    %37 = vector.broadcast %36 : vector<32x1xi1> to vector<32x1xi1>
    %38 = arith.xori %34, %37 : vector<32x1xi1>
    %39 = arith.andi %38, %32 : vector<32x1xi1>
    %40 = vector.broadcast %28 : i32 to vector<32x1xi32>
    %41 = arith.addi %30, %40 : vector<32x1xi32>
    %42 = arith.select %39, %41, %30 : vector<32x1xi1>, vector<32x1xi32>
    %c15_i32 = arith.constant 15 : i32
    %43 = vector.broadcast %c15_i32 : i32 to vector<32x1xi32>
    %44 = arith.cmpi eq, %42, %43 : vector<32x1xi32>
    %c31_i32 = arith.constant 31 : i32
    %45 = tpu.dynamic_rotate %2 by %c31_i32 dim 0 : vector<32x32xf32>, i32 -> vector<32x32xf32>
    %cst_13 = arith.constant 0.000000e+00 : f32
    %46 = vector.shape_cast %44 : vector<32x1xi1> to vector<32x1xi1>
    %47 = vector.broadcast %46 : vector<32x1xi1> to vector<32x32xi1>
    %48 = vector.broadcast %cst_13 : f32 to vector<32x32xf32>
    %49 = arith.select %47, %48, %45 : vector<32x32xi1>, vector<32x32xf32>
    %50 = tpu.concatenate %26, %2, %49 in 1 : vector<32x32xf32>, vector<32x32xf32>, vector<32x32xf32> -> vector<32x96xf32>
    %51 = arith.truncf %50 : vector<32x96xf32> to vector<32x96xbf16>
    %c0_14 = arith.constant 0 : index
    %c0_15 = arith.constant 0 : index
    %52 = vector.load %arg2[%c0_14, %c0_15] : memref<96x16xbf16, #tpu.memory_space<vmem>>, vector<96x16xbf16>
    %cst_16 = arith.constant dense<0.000000e+00> : vector<32x16xf32>
    %53 = tpu.matmul %51, %52, %cst_16 {dimension_numbers = #tpu.dot_dimension_numbers<[1], [0], [0], [1], [0, 0, 1, 1], [], []>} : vector<32x96xbf16>, vector<96x16xbf16>, vector<32x16xf32> -> vector<32x16xf32>
    %cst_17 = arith.constant 0.000000e+00 : f32
    %54 = vector.broadcast %cst_17 : f32 to vector<32x16xf32>
    %55 = arith.maximumf %53, %54 : vector<32x16xf32>
    %56 = arith.truncf %55 : vector<32x16xf32> to vector<32x16xbf16>
    %c0_18 = arith.constant 0 : index
    %c0_19 = arith.constant 0 : index
    %57 = vector.load %arg3[%c0_18, %c0_19] : memref<16x32xbf16, #tpu.memory_space<vmem>>, vector<16x32xbf16>
    %cst_20 = arith.constant dense<0.000000e+00> : vector<32x32xf32>
    %58 = tpu.matmul %56, %57, %cst_20 {dimension_numbers = #tpu.dot_dimension_numbers<[1], [0], [0], [1], [0, 0, 1, 1], [], []>} : vector<32x16xbf16>, vector<16x32xbf16>, vector<32x32xf32> -> vector<32x32xf32>
    %59 = arith.addf %0, %58 : vector<32x32xf32>
    %c0_21 = arith.constant 0 : index
    %c0_22 = arith.constant 0 : index
    %60 = vector.load %arg4[%c0_21, %c0_22] : memref<32x32xf32, #tpu.memory_space<vmem>>, vector<32x32xf32>
    tpu.vector_store %arg4[%c0_21, %c0_22], %59 {strides = array<i32>} : memref<32x32xf32, #tpu.memory_space<vmem>>, vector<32x32xf32>,
    return
  }
  func.func @transform_0(%arg0: i32) -> (i32, i32) {
    %c0_i32 = arith.constant 0 : i32
    %c0_i32_0 = arith.constant 0 : i32
    return %arg0, %c0_i32 : i32, i32
  }
  func.func @transform_1(%arg0: i32) -> (i32, i32) {
    %c0_i32 = arith.constant 0 : i32
    %c0_i32_0 = arith.constant 0 : i32
    %c0_i32_1 = arith.constant 0 : i32
    return %c0_i32, %c0_i32_0 : i32, i32
  }
  func.func @transform_2(%arg0: i32) -> (i32, i32) {
    %c0_i32 = arith.constant 0 : i32
    %c0_i32_0 = arith.constant 0 : i32
    %c0_i32_1 = arith.constant 0 : i32
    return %c0_i32, %c0_i32_0 : i32, i32
  }
  func.func @transform_3(%arg0: i32) -> (i32, i32) {
    %c0_i32 = arith.constant 0 : i32
    %c0_i32_0 = arith.constant 0 : i32
    return %arg0, %c0_i32 : i32, i32
  }
}

</mosaic_0001>

<llo_original>
// kernel: tpu_custom_call.1
$region0: #{tpu_custom_call.1}
  #allocation0 [shape = 'u32[]', space=smem, size = 0x4, offset = 0x4, fixed_abs, tag = 'smem constant byte address 0x4 - core index']
  #allocation1 [shape = 'u32[144,128]{1,0:T(1,128)}', space=vmem, size = 0x12000, scoped, tag = 'internal scratch']
  %s0 = inlined_call_operand.vmem [shape: f32[32,32], index: 0, kind: input, shape index: {}]
  %s1 = inlined_call_operand.vmem [shape: bf16[96,16], index: 1, kind: input, shape index: {}]
  %s2 = inlined_call_operand.vmem [shape: bf16[16,32], index: 2, kind: input, shape index: {}]
  %s3 = inlined_call_operand.hbm [shape: f32[32,32], index: 3, kind: output, shape index: {}]
  %s4 = sld [smem:[#allocation0]]
  $region22: #{tpu_custom_call.1} parent=0
    _
  %s6 = ssub.s32 1, %s4
  %s7 = scalar_select 0, %s6, %s4
  $region1: #{tpu_custom_call.1} parent=0
    #allocation2 [shape = 'u8[16384]{0}', space=vmem, size = 0x4000, scoped, tag = 'output window, operand 0, single buffered']
    #allocation3 [shape = 's32[1]{0}', space=sflag, size = 0x4, scoped, tag = 'scoped memory for tpu_custom_call.1']
    %8 = vsyncpa [#allocation3], 0
    // Predicated region
    $region2: #{tpu_custom_call.1} parent=1 // pred_check
      _
    $region3: #{tpu_custom_call.1} parent=1 // pred_check_branch
      %10 = sbr.rel (0) target = $region5
    $region4: #{tpu_custom_call.1} parent=1 // pred_region
      _
    $region5: #{tpu_custom_call.1} parent=1 // pred_fallthru
      _
    // Predicated region
    $region6: #{tpu_custom_call.1} parent=1 // pred_check
      _
    $region7: #{tpu_custom_call.1} parent=1 // pred_check_branch
      %12 = sbr.rel (0) target = $region9
    $region8: #{tpu_custom_call.1} parent=1 // pred_region
      _
    $region9: #{tpu_custom_call.1} parent=1 // pred_fallthru
      _
    // Predicated region
    $region10: #{tpu_custom_call.1} parent=1 // pred_check
      _
    $region11: #{tpu_custom_call.1} parent=1 // pred_check_branch
      %14 = sbr.rel (0) target = $region13
    $region12: #{tpu_custom_call.1} parent=1 // pred_region
      _
    $region13: #{tpu_custom_call.1} parent=1 // pred_fallthru
      _
    %v16 = vld [vmem:[%s0] sm:$0xff]
    %v17 = vld [vmem:[%s0 + $0x8] sm:$0xff]
    %v18 = vld [vmem:[%s0 + $0x10] sm:$0xff]
    %v19 = vld [vmem:[%s0 + $0x18] sm:$0xff]
    %v20 = vmax.f32 %v16, 0.0
    %v21 = vmax.f32 %v17, 0.0
    %v22 = vmax.f32 %v18, 0.0
    %v23 = vmax.f32 %v19, 0.0
    %v24 = vlaneseq
    %v25 = vshrl.u32 %v24, 7
    %v26 = vadd.s32 %v25, 8
    %v27 = vadd.s32 %v25, 16
    %v28 = vadd.s32 %v25, 24
    %vm29 = vcmp.lt.s32.totalorder %v25, 0
    %v30 = vsub.s32 0, %v25
    %v31 = vsel %vm29, %v30, %v25
    %v32 = vshrl.u32 %v31, 4
    %v33 = vand.u32 %v31, 15
    %v34 = vsub.s32 0, %v33
    %v35 = vsel %vm29, %v34, %v33
    %vm36 = vcmp.lt.s32.totalorder %v26, 0
    %v37 = vsub.s32 0, %v26
    %v38 = vsel %vm36, %v37, %v26
    %v39 = vshrl.u32 %v38, 4
    %v40 = vand.u32 %v38, 15
    %v41 = vsub.s32 0, %v40
    %v42 = vsel %vm36, %v41, %v40
    %vm43 = vcmp.lt.s32.totalorder %v27, 0
    %v44 = vsub.s32 0, %v27
    %v45 = vsel %vm43, %v44, %v27
    %v46 = vshrl.u32 %v45, 4
    %v47 = vand.u32 %v45, 15
    %v48 = vsub.s32 0, %v47
    %v49 = vsel %vm43, %v48, %v47
    %vm50 = vcmp.lt.s32.totalorder %v28, 0
    %v51 = vsub.s32 0, %v28
    %v52 = vsel %vm50, %v51, %v28
    %v53 = vshrl.u32 %v52, 4
    %v54 = vand.u32 %v52, 15
    %v55 = vsub.s32 0, %v54
    %v56 = vsel %vm50, %v55, %v54
    %vm57 = vcmp.ne.s32.totalorder %v35, 0
    %vm58 = vcmp.ne.s32.totalorder %v42, 0
    %vm59 = vcmp.ne.s32.totalorder %v49, 0
    %vm60 = vcmp.ne.s32.totalorder %v56, 0
    %vm61 = vcmp.lt.s32.totalorder %v35, 0
    %vm62 = vcmp.lt.s32.totalorder %v42, 0
    %vm63 = vcmp.lt.s32.totalorder %v49, 0
    %vm64 = vcmp.lt.s32.totalorder %v56, 0
    %vm65 = vmand %vm61, %vm57
    %vm66 = vmand %vm62, %vm58
    %vm67 = vmand %vm63, %vm59
    %vm68 = vmand %vm64, %vm60
    %v69 = vadd.s32 %v35, 16
    %v70 = vadd.s32 %v42, 16
    %v71 = vadd.s32 %v49, 16
    %v72 = vadd.s32 %v56, 16
    %v73 = vsel %vm65, %v69, %v35
    %v74 = vsel %vm66, %v70, %v42
    %v75 = vsel %vm67, %v71, %v49
    %v76 = vsel %vm68, %v72, %v56
    %vm77 = vcmp.eq.s32.totalorder %v73, 0
    %vm78 = vcmp.eq.s32.totalorder %v74, 0
    %vm79 = vcmp.eq.s32.totalorder %v75, 0
    %vm80 = vcmp.eq.s32.totalorder %v76, 0
    %v81 = vrot.slane %v20, 7
    %v82 = vrot.slane %v21, 7
    %v83 = vrot.slane %v22, 7
    %v84 = vrot.slane %v23, 7
    %vm85 = vcmp.lt.s32.totalorder %v25, 1
    %v86 = vsel %vm85, %v83, %v84
    %v87 = vsel %vm85, %v82, %v83
    %v88 = vsel %vm85, %v81, %v82
    %v89 = vsel %vm85, %v84, %v81
    %v90 = vsel %vm77, 1, 0
    %v91 = vsel %vm78, 1, 0
    %v92 = vsel %vm79, 1, 0
    %v93 = vsel %vm80, 1, 0
    %vm94 = vcmp.eq.s32.totalorder %v90, 1
    %vm95 = vcmp.eq.s32.totalorder %v91, 1
    %vm96 = vcmp.eq.s32.totalorder %v92, 1
    %vm97 = vcmp.eq.s32.totalorder %v93, 1
    %v98 = vsel %vm94, 0.0, %v89
    %v99 = vsel %vm95, 0.0, %v88
    %v100 = vsel %vm96, 0.0, %v87
    %v101 = vsel %vm97, 0.0, %v86
    %vm102 = vcmp.eq.s32.totalorder %v73, 15
    %vm103 = vcmp.eq.s32.totalorder %v74, 15
    %vm104 = vcmp.eq.s32.totalorder %v75, 15
    %vm105 = vcmp.eq.s32.totalorder %v76, 15
    %v106 = vrot.slane %v20, 1
    %v107 = vrot.slane %v21, 1
    %v108 = vrot.slane %v22, 1
    %v109 = vrot.slane %v23, 1
    %vm110 = vcmp.lt.s32.totalorder %v25, 7
    %v111 = vsel %vm110, %v108, %v109
    %v112 = vsel %vm110, %v107, %v108
    %v113 = vsel %vm110, %v106, %v107
    %v114 = vsel %vm110, %v109, %v106
    %v115 = vsel %vm102, 1, 0
    %v116 = vsel %vm103, 1, 0
    %v117 = vsel %vm104, 1, 0
    %v118 = vsel %vm105, 1, 0
    %vm119 = vcmp.eq.s32.totalorder %v115, 1
    %vm120 = vcmp.eq.s32.totalorder %v116, 1
    %vm121 = vcmp.eq.s32.totalorder %v117, 1
    %vm122 = vcmp.eq.s32.totalorder %v118, 1
    %v123 = vsel %vm119, 0.0, %v113
    %v124 = vsel %vm120, 0.0, %v112
    %v125 = vsel %vm121, 0.0, %v111
    %v126 = vsel %vm122, 0.0, %v114
    %131 = vrot.lane.b32.xlu0 %v20, 32
    %v132 = vpop.permute.xlu0 %131
    %133 = vrot.lane.b32.xlu0 %v21, 32
    %v134 = vpop.permute.xlu0 %133
    %135 = vrot.lane.b32.xlu0 %v22, 32
    %v136 = vpop.permute.xlu0 %135
    %137 = vrot.lane.b32.xlu0 %v23, 32
    %v138 = vpop.permute.xlu0 %137
    %147 = vrot.lane.b32.xlu0 %v123, 64
    %v148 = vpop.permute.xlu0 %147
    %149 = vrot.lane.b32.xlu0 %v124, 64
    %v150 = vpop.permute.xlu0 %149
    %151 = vrot.lane.b32.xlu0 %v125, 64
    %v152 = vpop.permute.xlu0 %151
    %153 = vrot.lane.b32.xlu0 %v126, 64
    %v154 = vpop.permute.xlu0 %153
    %vm159 = vcmask 261120
    %v160 = vsel %vm159, %v98, %v132
    %v161 = vsel %vm159, %v99, %v134
    %v162 = vsel %vm159, %v100, %v136
    %v163 = vsel %vm159, %v101, %v138
    %vm164 = vcmask 523264
    %v165 = vsel %vm164, %v160, %v148
    %v166 = vsel %vm164, %v161, %v150
    %v167 = vsel %vm164, %v162, %v152
    %v168 = vsel %vm164, %v163, %v154
    %v169 = vpack.c.bf16 %v166, %v165
    %v170 = vpack.c.bf16 %v168, %v167
    %v171 = vld [vmem:[%s1] sm:$0xf]
    %v172 = vld [vmem:[%s1 + $0x4] sm:$0xf]
    %v173 = vld [vmem:[%s1 + $0x8] sm:$0xf]
    %v174 = vld [vmem:[%s1 + $0xc] sm:$0xf]
    %v175 = vld [vmem:[%s1 + $0x10] sm:$0xf]
    %v176 = vld [vmem:[%s1 + $0x14] sm:$0xf]
    %v177 = vld [vmem:[%s1 + $0x18] sm:$0xf]
    %v178 = vld [vmem:[%s1 + $0x1c] sm:$0xf]
    %v179 = vld [vmem:[%s1 + $0x20] sm:$0xf]
    %v180 = vld [vmem:[%s1 + $0x24] sm:$0xf]
    %v181 = vld [vmem:[%s1 + $0x28] sm:$0xf]
    %v182 = vld [vmem:[%s1 + $0x2c] sm:$0xf]
    %v195 = vunpack.c.l.b16 %v171
    %v196 = vunpack.c.l.b16 %v172
    %v197 = vunpack.c.l.b16 %v173
    %v198 = vunpack.c.l.b16 %v174
    %v199 = vunpack.c.l.b16 %v175
    %v200 = vunpack.c.l.b16 %v176
    %v201 = vunpack.c.l.b16 %v177
    %v202 = vunpack.c.l.b16 %v178
    %v203 = vunpack.c.l.b16 %v179
    %v204 = vunpack.c.l.b16 %v180
    %v205 = vunpack.c.l.b16 %v181
    %v206 = vunpack.c.l.b16 %v182
    %v207 = vpack.c.b16 %v196, %v195
    %v208 = vpack.c.b16 %v198, %v197
    %v209 = vpack.c.b16 %v200, %v199
    %v210 = vpack.c.b16 %v202, %v201
    %v211 = vpack.c.b16 %v204, %v203
    %v212 = vpack.c.b16 %v206, %v205
    %vm219 = vcmask 785408
    %v221 = vsel %vm219, %v169, 0
    %v224 = vsel %vm219, %v170, 0
    %226 = vmatprep.subr.bf16.mxu0 0
    %227 = vmatpush1.bf16.msra.mxu0 0
    %228 = vmatprep.subr.bf16.mxu0 0
    %229 = vmatpush1.bf16.msra.mxu0 0
    %230 = vmatprep.subr.bf16.mxu0 0
    %231 = vmatpush1.bf16.msra.mxu0 %v212
    %232 = vmatprep.subr.bf16.mxu0 0
    %233 = vmatpush1.bf16.msra.mxu0 %v211
    %234 = vmatprep.subr.bf16.mxu0 0
    %235 = vmatpush1.bf16.msra.mxu0 %v210
    %236 = vmatprep.subr.bf16.mxu0 0
    %237 = vmatpush1.bf16.msra.mxu0 %v209
    %238 = vmatprep.subr.bf16.mxu0 0
    %239 = vmatpush1.bf16.msra.mxu0 %v208
    %240 = vmatprep.subr.bf16.mxu0 0
    %241 = vmatpush1.bf16.msra.mxu0 %v207
    %242 = vmatprep.subr.bf16.mxu0 0
    %243 = vmatpush2.bf16.msra.mxu0 0
    %244 = vmatprep.subr.bf16.mxu0 0
    %245 = vmatpush2.bf16.msra.mxu0 0
    %246 = vmatprep.subr.bf16.mxu0 0
    %247 = vmatpush2.bf16.msra.mxu0 0
    %248 = vmatprep.subr.bf16.mxu0 0
    %249 = vmatpush2.bf16.msra.mxu0 0
    %250 = vmatprep.subr.bf16.mxu0 0
    %251 = vmatpush2.bf16.msra.mxu0 0
    %252 = vmatprep.subr.bf16.mxu0 0
    %253 = vmatpush2.bf16.msra.mxu0 0
    %254 = vmatprep.subr.bf16.mxu0 0
    %255 = vmatpush2.bf16.msra.mxu0 0
    %256 = vmatprep.subr.bf16.mxu0 0
    %257 = vmatpush2.bf16.msra.mxu0 0
    %258 = vmatprep.mubr.bf16.mxu0 0
    %259 = vmatmul.mubr.bf16.gmra.mxu0 %v221
    %v260 = vpop.f32.mrf.mxu0
    %v261 = vadd.f32 0.0, %v260
    %v262 = vpop.f32.mrf.mxu0
    %v263 = vpop.f32.mrf.mxu0
    %v264 = vadd.f32 0.0, %v263
    %v265 = vpop.f32.mrf.mxu0
    %266 = vmatprep.mubr.bf16.mxu0 0
    %267 = vmatmul.mubr.bf16.gmra.mxu0 %v224
    %v268 = vpop.f32.mrf.mxu0
    %v269 = vadd.f32 0.0, %v268
    %v270 = vpop.f32.mrf.mxu0
    %v271 = vpop.f32.mrf.mxu0
    %v272 = vadd.f32 0.0, %v271
    %v273 = vpop.f32.mrf.mxu0
    %274 = vdwg.mxu0
    %v275 = vmax.f32 %v261, 0.0
    %v276 = vmax.f32 %v264, 0.0
    %v277 = vmax.f32 %v269, 0.0
    %v278 = vmax.f32 %v272, 0.0
    %v279 = vpack.c.bf16 %v276, %v275
    %v280 = vpack.c.bf16 %v278, %v277
    %v281 = vld [vmem:[%s2] sm:$0xf]
    %v282 = vld [vmem:[%s2 + $0x4] sm:$0xf]
    %v285 = vunpack.c.l.b16 %v281
    %v286 = vunpack.c.l.b16 %v282
    %v287 = vpack.c.b16 %v286, %v285
    %vm289 = vcmask 130048
    %v291 = vsel %vm289, %v279, 0
    %v294 = vsel %vm289, %v280, 0
    %296 = vmatprep.subr.bf16.mxu0 0
    %297 = vmatpush1.bf16.msra.mxu0 0
    %298 = vmatprep.subr.bf16.mxu0 0
    %299 = vmatpush1.bf16.msra.mxu0 0
    %300 = vmatprep.subr.bf16.mxu0 0
    %301 = vmatpush1.bf16.msra.mxu0 0
    %302 = vmatprep.subr.bf16.mxu0 0
    %303 = vmatpush1.bf16.msra.mxu0 0
    %304 = vmatprep.subr.bf16.mxu0 0
    %305 = vmatpush1.bf16.msra.mxu0 0
    %306 = vmatprep.subr.bf16.mxu0 0
    %307 = vmatpush1.bf16.msra.mxu0 0
    %308 = vmatprep.subr.bf16.mxu0 0
    %309 = vmatpush1.bf16.msra.mxu0 0
    %310 = vmatprep.subr.bf16.mxu0 0
    %311 = vmatpush1.bf16.msra.mxu0 %v287
    %312 = vmatprep.subr.bf16.mxu0 0
    %313 = vmatpush2.bf16.msra.mxu0 0
    %314 = vmatprep.subr.bf16.mxu0 0
    %315 = vmatpush2.bf16.msra.mxu0 0
    %316 = vmatprep.subr.bf16.mxu0 0
    %317 = vmatpush2.bf16.msra.mxu0 0
    %318 = vmatprep.subr.bf16.mxu0 0
    %319 = vmatpush2.bf16.msra.mxu0 0
    %320 = vmatprep.subr.bf16.mxu0 0
    %321 = vmatpush2.bf16.msra.mxu0 0
    %322 = vmatprep.subr.bf16.mxu0 0
    %323 = vmatpush2.bf16.msra.mxu0 0
    %324 = vmatprep.subr.bf16.mxu0 0
    %325 = vmatpush2.bf16.msra.mxu0 0
    %326 = vmatprep.subr.bf16.mxu0 0
    %327 = vmatpush2.bf16.msra.mxu0 0
    %328 = vmatprep.mubr.bf16.mxu0 0
    %329 = vmatmul.mubr.bf16.gmra.mxu0 %v291
    %v330 = vpop.f32.mrf.mxu0
    %v331 = vadd.f32 0.0, %v330
    %v332 = vpop.f32.mrf.mxu0
    %v333 = vpop.f32.mrf.mxu0
    %v334 = vadd.f32 0.0, %v333
    %v335 = vpop.f32.mrf.mxu0
    %336 = vmatprep.mubr.bf16.mxu0 0
    %337 = vmatmul.mubr.bf16.gmra.mxu0 %v294
    %v338 = vpop.f32.mrf.mxu0
    %v339 = vadd.f32 0.0, %v338
    %v340 = vpop.f32.mrf.mxu0
    %v341 = vpop.f32.mrf.mxu0
    %v342 = vadd.f32 0.0, %v341
    %v343 = vpop.f32.mrf.mxu0
    %344 = vdwg.mxu0
    %v345 = vadd.f32 %v16, %v331
    %v346 = vadd.f32 %v17, %v334
    %v347 = vadd.f32 %v18, %v339
    %v348 = vadd.f32 %v19, %v342
    %349 = vst.msk [vmem:[#allocation2] sm:$0xff] %vm159, %v345
    %350 = vst.msk [vmem:[#allocation2 + $0x8] sm:$0xff] %vm159, %v346
    %351 = vst.msk [vmem:[#allocation2 + $0x10] sm:$0xff] %vm159, %v347
    %352 = vst.msk [vmem:[#allocation2 + $0x18] sm:$0xff] %vm159, %v348
    // Predicated region
    $region14: #{tpu_custom_call.1} parent=1 // pred_check
      _
    $region15: #{tpu_custom_call.1} parent=1 // pred_check_branch
      %354 = sbr.rel (0) target = $region17
    $region16: #{tpu_custom_call.1} parent=1 // pred_region
      %s356 = ssub.s32 512, 512
      %357 = vsyncadd [#allocation3], %s356
      %s358 = sshll.u32 [#allocation2], 4
      %s359 = int_to_ptr.vmem [resolvable:$true] %s358
      %364 = dma.vmem_to_hbm [thread:$0]  %s359, 512, %s3, [#allocation3], 128, 128, 8
    $region17: #{tpu_custom_call.1} parent=1 // pred_fallthru
      _
    // Predicated region
    $region18: #{tpu_custom_call.1} parent=1 // pred_check
      _
    $region19: #{tpu_custom_call.1} parent=1 // pred_check_branch
      %366 = sbr.rel (0) target = $region21
    $region20: #{tpu_custom_call.1} parent=1 // pred_region
      %367 = dma.done [#allocation3], 512
    $region21: #{tpu_custom_call.1} parent=1 // pred_fallthru
      _
    %368 = vsyncpa [#allocation3], 1

</llo_original>
